<compile_context>
chip_gen: v6e
topology: v6e:2x2x1
jax: 0.10.0
libtpu: 0.0.40
codegen_flags: <defaults>
</compile_context>

<pallas_src>
import functools

import jax
import jax.numpy as jnp
from jax.experimental import pallas as pl
from jax.experimental.pallas import tpu as pltpu


_LANE = 128
_MIB = 1024 * 1024


def _sublane_multiple(dtype) -> int:
    # Minimum second-minor tile extent per dtype packing.
    itemsize = jnp.dtype(dtype).itemsize
    return {4: 8, 2: 16, 1: 32}.get(itemsize, 8)


def _round_up(a: int, m: int) -> int:
    return -(-a // m) * m


@functools.lru_cache(maxsize=1)
def _chip_config():
    """Returns (block_bytes, num_tensorcores, vmem_limit_bytes) for the local chip."""
    kind = ""
    try:
        kind = jax.devices()[0].device_kind.lower()
    except Exception:  # pragma: no cover - be conservative if query fails
        pass
    if "v7" in kind or "tpu7" in kind:
        # v7x: 2 TensorCores/chip, ~3.2 TB/s HBM.  4 live block buffers x 4 MiB
        # = 16 MiB, still inside the 32 MiB scoped default (64 MiB physical).
        return 4 * _MIB, 2, 32 * _MIB
    if "v6" in kind:
        # v6e: ~85% of roofline already at 2 MiB; 3 MiB is a small, free win.
        return 3 * _MIB, 1, 32 * _MIB
    # v5e / unknown: 2 MiB blocks keep 4 live buffers (8 MiB) inside the
    # 16 MiB scoped-VMEM default without touching limits.
    return 2 * _MIB, 1, None


def _scale_kernel(scale_ref, x_ref, o_ref):
    # scale_ref: (1, 1) f32 in SMEM; x_ref / o_ref: VMEM tiles.
    s = scale_ref[0, 0].astype(x_ref.dtype)          # multiply in native dtype
    o_ref[...] = (x_ref[...] * s).astype(o_ref.dtype)


def _choose_block_rows(rows, row_bytes, sub, block_bytes, num_tc):
    # Largest ~block_bytes tile, rounded down to a sublane multiple.
    target_rows = max(sub, (block_bytes // row_bytes) // sub * sub)
    block_rows = min(rows, target_rows)
    if num_tc >= 2 and rows > sub:
        # v7x only: prefer >=2 steps per TensorCore (4 total) so each core's
        # double buffer overlaps read and write DMA -- but never shrink a
        # block below ~512 KiB.
        min_split_rows = max(sub, ((512 * 1024) // row_bytes) // sub * sub)
        for n_steps in (4, 2):
            split_rows = _round_up(pl.cdiv(rows, n_steps), sub)
            if min_split_rows <= split_rows < rows:
                block_rows = min(block_rows, split_rows)
                break
    # Invariant: block_rows is a multiple of `sub`, or equals the full extent.
    return block_rows


def _scale_2d(x2d: jax.Array, scale_smem: jax.Array, *, donate: bool = False) -> jax.Array:
    rows, lane = x2d.shape
    dtype = x2d.dtype
    itemsize = jnp.dtype(dtype).itemsize
    sub = _sublane_multiple(dtype)
    block_bytes, num_tc, vmem_limit = _chip_config()

    block_rows = _choose_block_rows(rows, lane * itemsize, sub, block_bytes, num_tc)
    grid = (pl.cdiv(rows, block_rows),)

    extra = {}
    if donate:
        # x2d is pallas_call input index 1 (after the SMEM scalar); output 0.
        extra["input_output_aliases"] = {1: 0}

    return pl.pallas_call(
        _scale_kernel,
        out_shape=jax.ShapeDtypeStruct((rows, lane), dtype),
        grid_spec=pltpu.PrefetchScalarGridSpec(
            num_scalar_prefetch=0,
            grid=grid,
            in_specs=[
                pl.BlockSpec(memory_space=pltpu.MemorySpace.SMEM),    # scale (1,1) f32
                pl.BlockSpec((block_rows, lane), lambda i: (i, 0)),   # x tile
            ],
            out_specs=pl.BlockSpec((block_rows, lane), lambda i: (i, 0)),
        ),
        compiler_params=pltpu.CompilerParams(
            dimension_semantics=("parallel",),
            vmem_limit_bytes=vmem_limit,
        ),
        **extra,
    )(scale_smem, x2d)


def scale_forward(x: jax.Array, scale: jax.Array, *, donate: bool = False) -> jax.Array:
    """Elementwise x * scale (learnable scalar) using a Pallas TPU kernel."""
    orig_shape = x.shape
    n = x.size
    if n == 0:
        return x

    scale_smem = jnp.asarray(scale, dtype=jnp.float32).reshape(1, 1)
    flat = x.reshape(-1)
    n_main = (n // _LANE) * _LANE

    if n_main == n:
        # Fast path for any n % 128 == 0 (incl. bf16 shapes that previously
        # needed n % 2048 == 0): free reshape to a lane-dense slab, no copies.
        out2d = _scale_2d(flat.reshape(n // _LANE, _LANE), scale_smem, donate=donate)
        return out2d.reshape(orig_shape)

    # Ragged size: kernel on the 128-aligned prefix, plain jnp on the <128
    # element tail -- avoids the old full zero-pad + slice round trip.
    s_native = scale_smem[0, 0].astype(x.dtype)
    tail_out = flat[n_main:] * s_native
    if n_main == 0:
        # Tiny tensor (< 128 elements): not worth a kernel launch.
        return tail_out.reshape(orig_shape)
    head_out = _scale_2d(
        flat[:n_main].reshape(n_main // _LANE, _LANE), scale_smem, donate=donate
    ).reshape(-1)
    return jnp.concatenate([head_out, tail_out]).reshape(orig_shape)


if __name__ == "__main__":
    key = jax.random.PRNGKey(0)
    # NCHW input consistent with how Scale is used inside GFL heads.
    x = jax.random.normal(key, (2, 4, 16, 16), dtype=jnp.float32)

    # Deterministic parameter init matching Scale(scale=1.0).__init__.
    scale_param = jnp.array(1.0, dtype=jnp.float32)

    # Fast path, scale = 1.0.
    y = scale_forward(x, scale_param)
    jax.block_until_ready(y)
    assert y.shape == x.shape and y.dtype == x.dtype
    assert jnp.allclose(y, x * scale_param, atol=1e-6, rtol=1e-6)

    # Fast path, non-trivial scale.
    y2 = scale_forward(x, jnp.array(2.5, dtype=jnp.float32))
    jax.block_until_ready(y2)
    assert jnp.allclose(y2, x * 2.5, atol=1e-6, rtol=1e-6)

    # n % 128 == 0 but rows not a multiple of the sublane count
    # (previously fell into the pad/slice path; now the fast path).
    x_mod128 = jax.random.normal(jax.random.PRNGKey(2), (10, 128), dtype=jnp.float32)
    y3 = scale_forward(x_mod128, jnp.array(1.5, dtype=jnp.float32))
    jax.block_until_ready(y3)
    assert jnp.allclose(y3, x_mod128 * 1.5, atol=1e-6, rtol=1e-6)

    # Ragged size (n % 128 != 0): prefix kernel + jnp tail.
    x_ragged = jax.random.normal(jax.random.PRNGKey(1), (3, 5, 7, 7), dtype=jnp.float32)
    y4 = scale_forward(x_ragged, jnp.array(0.5, dtype=jnp.float32))
    jax.block_until_ready(y4)
    assert y4.shape == x_ragged.shape
    assert jnp.allclose(y4, x_ragged * 0.5, atol=1e-6, rtol=1e-6)

    # bf16 input: multiply happens in bf16 (no f32 promotion of the tile).
    x_bf16 = x.astype(jnp.bfloat16)
    y5 = scale_forward(x_bf16, jnp.array(2.5, dtype=jnp.float32))
    jax.block_until_ready(y5)
    assert y5.dtype == jnp.bfloat16
    ref_bf16 = x_bf16 * jnp.asarray(2.5, dtype=jnp.bfloat16)
    assert jnp.allclose(y5.astype(jnp.float32), ref_bf16.astype(jnp.float32),
                        atol=1e-2, rtol=1e-2)

    print("KERNEL_OK")
</pallas_src>

<mosaic_0001>
module attributes {stable_mosaic.version = 11 : i64} {
  func.func @_scale_kernel(%arg0: i32, %arg1: memref<1x1xf32, #tpu.memory_space<smem>>, %arg2: memref<16x128xf32, #tpu.memory_space<vmem>>, %arg3: memref<16x128xf32, #tpu.memory_space<vmem>>) attributes {dimension_semantics = [#tpu.dimension_semantics<parallel>], iteration_bounds = array<i64: 1>, scalar_prefetch = 0 : i64, scratch_operands = 0 : i64, tpu.core_type = #tpu.core_type<tc>, window_params = [{transform_indices = @transform_0, window_bounds = array<i64: 1, 1>}, {transform_indices = @transform_1, window_bounds = array<i64: 16, 128>}, {transform_indices = @transform_2, window_bounds = array<i64: 16, 128>}]} {
    %c0 = arith.constant 0 : index
    %c0_0 = arith.constant 0 : index
    %0 = memref.load %arg1[%c0, %c0_0] : memref<1x1xf32, #tpu.memory_space<smem>>
    %c0_1 = arith.constant 0 : index
    %c0_2 = arith.constant 0 : index
    %1 = vector.load %arg2[%c0_1, %c0_2] : memref<16x128xf32, #tpu.memory_space<vmem>>, vector<16x128xf32>
    %2 = vector.broadcast %0 : f32 to vector<16x128xf32>
    %3 = arith.mulf %1, %2 : vector<16x128xf32>
    %c0_3 = arith.constant 0 : index
    %c0_4 = arith.constant 0 : index
    %4 = vector.load %arg3[%c0_3, %c0_4] : memref<16x128xf32, #tpu.memory_space<vmem>>, vector<16x128xf32>
    tpu.vector_store %arg3[%c0_3, %c0_4], %3 {strides = array<i32>} : memref<16x128xf32, #tpu.memory_space<vmem>>, vector<16x128xf32>,
    return
  }
  func.func @transform_0(%arg0: i32) -> (i32, i32) {
    %c0_i32 = arith.constant 0 : i32
    %c0_i32_0 = arith.constant 0 : i32
    %c0_i32_1 = arith.constant 0 : i32
    return %c0_i32, %c0_i32_0 : i32, i32
  }
  func.func @transform_1(%arg0: i32) -> (i32, i32) {
    %c0_i32 = arith.constant 0 : i32
    %c0_i32_0 = arith.constant 0 : i32
    return %arg0, %c0_i32 : i32, i32
  }
  func.func @transform_2(%arg0: i32) -> (i32, i32) {
    %c0_i32 = arith.constant 0 : i32
    %c0_i32_0 = arith.constant 0 : i32
    return %arg0, %c0_i32 : i32, i32
  }
}

</mosaic_0001>

<llo_original>
// kernel: tpu_custom_call.1
$region0: #{tpu_custom_call.1}
  #allocation0 [shape = 'u32[]', space=smem, size = 0x4, offset = 0x4, fixed_abs, tag = 'smem constant byte address 0x4 - core index']
  #allocation1 [shape = 'u32[144,128]{1,0:T(1,128)}', space=vmem, size = 0x12000, scoped, tag = 'internal scratch']
  #allocation2 [shape = 'f32[1,1]{1,0:T(1,128)S(6)}', space=smem, size = 0x200, scoped, tag = 'scoped memory for tpu_custom_call.1']
  %s0 = inlined_call_operand.<no memory space> [shape: f32[1,1], index: 0, kind: input, shape index: {}]
  %s1 = inlined_call_operand.hbm [shape: f32[16,128], index: 1, kind: input, shape index: {}]
  %s2 = inlined_call_operand.hbm [shape: f32[16,128], index: 2, kind: output, shape index: {}]
  %s3 = sld [smem:[#allocation0]]
  $region22: #{tpu_custom_call.1} parent=0
    _
  %s5 = ssub.s32 1, %s3
  %s6 = scalar_select 0, %s5, %s3
  %7 = sst [smem:[#allocation2]] %s0
  $region1: #{tpu_custom_call.1} parent=0
    #allocation3 [shape = 'u8[8192]{0}', space=vmem, size = 0x2000, scoped, tag = 'input window, operand 1, single buffered']
    #allocation4 [shape = 's32[1]{0}', space=sflag, size = 0x4, scoped, tag = 'scoped memory for tpu_custom_call.1']
    #allocation5 [shape = 's32[1]{0}', space=sflag, size = 0x4, scoped, tag = 'scoped memory for tpu_custom_call.1']
    #allocation6 [shape = 'u8[8192]{0}', space=vmem, size = 0x2000, scoped, tag = 'output window, operand 0, single buffered']
    %8 = vsyncpa [#allocation4], 0
    %9 = vsyncpa [#allocation5], 0
    // Predicated region
    $region2: #{tpu_custom_call.1} parent=1 // pred_check
      _
    $region3: #{tpu_custom_call.1} parent=1 // pred_check_branch
      %11 = sbr.rel (0) target = $region5
    $region4: #{tpu_custom_call.1} parent=1 // pred_region
      _
    $region5: #{tpu_custom_call.1} parent=1 // pred_fallthru
      _
    // Predicated region
    $region6: #{tpu_custom_call.1} parent=1 // pred_check
      _
    $region7: #{tpu_custom_call.1} parent=1 // pred_check_branch
      %13 = sbr.rel (0) target = $region9
    $region8: #{tpu_custom_call.1} parent=1 // pred_region
      %s15 = ssub.s32 256, 256
      %16 = vsyncadd [#allocation4], %s15
      %s17 = sshll.u32 [#allocation3], 4
      %s18 = int_to_ptr.vmem [resolvable:$true] %s17
      %23 = dma.hbm_to_vmem [thread:$0]  %s1, 256, %s18, [#allocation4], 128, 128, 8
    $region9: #{tpu_custom_call.1} parent=1 // pred_fallthru
      _
    // Predicated region
    $region10: #{tpu_custom_call.1} parent=1 // pred_check
      _
    $region11: #{tpu_custom_call.1} parent=1 // pred_check_branch
      %25 = sbr.rel (0) target = $region13
    $region12: #{tpu_custom_call.1} parent=1 // pred_region
      %26 = dma.done [#allocation4], 256
    $region13: #{tpu_custom_call.1} parent=1 // pred_fallthru
      _
    %s27 = sld [smem:[#allocation2]]
    %v28 = vld [vmem:[#allocation3] sm:$0xff]
    %v29 = vld [vmem:[#allocation3 + $0x8] sm:$0xff]
    %v30 = vstv %s27
    %v31 = vmul.f32 %v28, %v30
    %v32 = vmul.f32 %v29, %v30
    %33 = vst [vmem:[#allocation6] sm:$0xff] %v31
    %34 = vst [vmem:[#allocation6 + $0x8] sm:$0xff] %v32
    // Predicated region
    $region14: #{tpu_custom_call.1} parent=1 // pred_check
      _
    $region15: #{tpu_custom_call.1} parent=1 // pred_check_branch
      %36 = sbr.rel (0) target = $region17
    $region16: #{tpu_custom_call.1} parent=1 // pred_region
      %s38 = ssub.s32 256, 256
      %39 = vsyncadd [#allocation5], %s38
      %s40 = sshll.u32 [#allocation6], 4
      %s41 = int_to_ptr.vmem [resolvable:$true] %s40
      %46 = dma.vmem_to_hbm [thread:$0]  %s41, 256, %s2, [#allocation5], 128, 128, 8
    $region17: #{tpu_custom_call.1} parent=1 // pred_fallthru
      _
    // Predicated region
    $region18: #{tpu_custom_call.1} parent=1 // pred_check
      _
    $region19: #{tpu_custom_call.1} parent=1 // pred_check_branch
      %48 = sbr.rel (0) target = $region21
    $region20: #{tpu_custom_call.1} parent=1 // pred_region
      %49 = dma.done [#allocation5], 256
    $region21: #{tpu_custom_call.1} parent=1 // pred_fallthru
      _
    %50 = vsyncpa [#allocation4], 1
    %51 = vsyncpa [#allocation5], 1

</llo_original>
